<compile_context>
chip_gen: v7x
topology: tpu7x:2x2x1
jax: 0.10.0
libtpu: 0.0.40
codegen_flags: <defaults>
</compile_context>

<pallas_src>
import functools

import jax
import jax.numpy as jnp
from jax.experimental import pallas as pl
from jax.experimental.pallas import tpu as pltpu


def _att_dot_kernel(q_ref, y_ref, att_ref, sim_ref, *, apply_softmax: bool):
    # q_ref: (tb, tq, D), y_ref: (tb, K, D)
    # att_ref: (tb, tq, K), sim_ref: (tb, 1, tq)
    q = q_ref[...]
    y = y_ref[...]

    # scores = q @ y^T per batch -> (tb, tq, K); f32 accumulation on the MXU.
    s = jnp.einsum("bqd,bkd->bqk", q, y, preferred_element_type=jnp.float32)

    # Row-wise max over K of the RAW scores, stored lane-dense as (tb, 1, tq).
    row_max = jnp.max(s, axis=-1)                              # (tb, tq)
    sim_ref[...] = row_max[:, None, :].astype(sim_ref.dtype)

    if apply_softmax:
        p = jnp.exp(s - row_max[:, :, None])                   # stable softmax
        denom = jnp.sum(p, axis=-1, keepdims=True)             # (tb, tq, 1)
        # Exact divide: EUP/VALU have slack on this mem-bound kernel and the
        # approximate reciprocal breaks parity with the reference.
        att = p / denom
    else:
        att = s
    att_ref[...] = att.astype(att_ref.dtype)


def _tpu_vmem_info():
    """(vmem_capacity_bytes, has_two_tensorcores) with a conservative fallback."""
    try:
        vmem = int(pltpu.get_tpu_info().vmem_capacity_bytes)
    except Exception:
        vmem = 64 << 20
    # v7x exposes 64 MiB VMEM per TensorCore and has 2 TCs/chip; v5e/v6e have
    # 128 MiB and a single TensorCore.
    return vmem, vmem <= (64 << 20)


def att_dot(query, y, softmax: bool = True, att_dtype=None):
    """query: (B, Q, D), y: (B, K, D) -> (att (B, Q, K), sim (B, 1, Q))."""
    B, Q, D = query.shape
    B2, K, D2 = y.shape
    assert B == B2 and D == D2

    out_dtype = jnp.promote_types(query.dtype, y.dtype)
    att_dtype = out_dtype if att_dtype is None else jnp.dtype(att_dtype)
    att_isz = jnp.dtype(att_dtype).itemsize
    out_isz = jnp.dtype(out_dtype).itemsize
    q_isz = jnp.dtype(query.dtype).itemsize
    y_isz = jnp.dtype(y.dtype).itemsize

    vmem_cap, two_cores = _tpu_vmem_info()
    vmem_limit = int(vmem_cap * 0.85)
    block_budget = int(vmem_limit * 0.85)   # double-buffered blocks + scratch

    def resident_bytes(tb, tq):
        q_b = tb * tq * D * q_isz
        y_b = tb * K * D * y_isz
        att_b = tb * tq * K * att_isz
        sim_b = tb * tq * out_isz
        scratch = 2 * tb * tq * K * 4       # f32 scores / exp intermediates
        return 2 * (q_b + y_b + att_b + sim_b) + scratch

    # Q tiling only when a full-Q block does not fit (large Q*K, e.g. on v7x).
    tq = Q
    if resident_bytes(1, Q) > block_budget and Q > 128:
        per_tq = 2 * D * q_isz + 2 * K * att_isz + 2 * out_isz + 2 * K * 4
        tq_fit = (block_budget - 2 * K * D * y_isz) // max(per_tq, 1)
        tq = max(128, (int(tq_fit) // 128) * 128)  # sim lane dim needs %128==0
        tq = min(tq, Q)

    # Batch tiling: as many batch rows per step as the VMEM budget allows.
    per_b = resident_bytes(1, tq)
    tb = max(1, min(block_budget // max(per_b, 1), B))
    # Only on 2-TensorCore chips keep >=2 grid steps so "parallel" can shard.
    if two_cores and B >= 2 and pl.cdiv(Q, tq) < 2:
        tb = min(tb, pl.cdiv(B, 2))

    nb = pl.cdiv(B, tb)
    nq = pl.cdiv(Q, tq)

    kernel = functools.partial(_att_dot_kernel, apply_softmax=softmax)

    att, sim = pl.pallas_call(
        kernel,
        out_shape=(
            jax.ShapeDtypeStruct((B, Q, K), att_dtype),
            jax.ShapeDtypeStruct((B, 1, Q), out_dtype),
        ),
        grid=(nb, nq),
        in_specs=[
            pl.BlockSpec((tb, tq, D), lambda b, qi: (b, qi, 0)),
            pl.BlockSpec((tb, K, D), lambda b, qi: (b, 0, 0)),
        ],
        out_specs=(
            pl.BlockSpec((tb, tq, K), lambda b, qi: (b, qi, 0)),
            pl.BlockSpec((tb, 1, tq), lambda b, qi: (b, 0, qi)),
        ),
        compiler_params=pltpu.CompilerParams(
            dimension_semantics=("parallel", "parallel"),
            vmem_limit_bytes=vmem_limit,
        ),
    )(query, y)
    return att, sim


def _reference(query, y, softmax=True):
    # HIGHEST precision so the XLA reference matches the full-f32 MXU
    # accumulation inside the kernel (default precision may use bf16 on TPU).
    att = jnp.einsum("bqd,bkd->bqk", query, y,
                     precision=jax.lax.Precision.HIGHEST)
    sim = jnp.max(att, axis=2)[:, None, :]
    if softmax:
        att = jax.nn.softmax(att, axis=2)
    return att, sim


if __name__ == "__main__":
    key = jax.random.PRNGKey(0)
    kq, ky = jax.random.split(key)

    B, Q, K, D = 2, 8, 8, 32
    query = jax.random.normal(kq, (B, Q, D), dtype=jnp.float32)
    y = jax.random.normal(ky, (B, K, D), dtype=jnp.float32)

    # softmax=True path
    att, sim = att_dot(query, y, softmax=True)
    jax.block_until_ready((att, sim))
    att_ref, sim_ref = _reference(query, y, softmax=True)
    assert att.shape == (B, Q, K) and sim.shape == (B, 1, Q)
    assert jnp.allclose(att, att_ref, atol=2e-3, rtol=2e-3)
    assert jnp.allclose(sim, sim_ref, atol=2e-3, rtol=2e-3)

    # softmax=False path (raw scores)
    att2, sim2 = att_dot(query, y, softmax=False)
    jax.block_until_ready((att2, sim2))
    att2_ref, sim2_ref = _reference(query, y, softmax=False)
    assert jnp.allclose(att2, att2_ref, atol=2e-3, rtol=2e-3)
    assert jnp.allclose(sim2, sim2_ref, atol=2e-3, rtol=2e-3)

    print("KERNEL_OK")
</pallas_src>

<mosaic_0001>
module attributes {stable_mosaic.version = 11 : i64} {
  func.func @_att_dot_kernel(%arg0: i32, %arg1: i32, %arg2: memref<1x8x32xf32, #tpu.memory_space<vmem>>, %arg3: memref<1x8x32xf32, #tpu.memory_space<vmem>>, %arg4: memref<1x8x8xf32, #tpu.memory_space<vmem>>, %arg5: memref<1x1x8xf32, #tpu.memory_space<vmem>>) attributes {dimension_semantics = [#tpu.dimension_semantics<parallel>, #tpu.dimension_semantics<parallel>], iteration_bounds = array<i64: 2, 1>, scalar_prefetch = 0 : i64, scratch_operands = 0 : i64, tpu.core_type = #tpu.core_type<tc>, window_params = [{transform_indices = @transform_0, window_bounds = array<i64: 1, 8, 32>}, {transform_indices = @transform_1, window_bounds = array<i64: 1, 8, 32>}, {transform_indices = @transform_2, window_bounds = array<i64: 1, 8, 8>}, {transform_indices = @transform_3, window_bounds = array<i64: 1, 1, 8>}]} {
    %c0 = arith.constant 0 : index
    %c0_0 = arith.constant 0 : index
    %c0_1 = arith.constant 0 : index
    %0 = vector.load %arg2[%c0, %c0_0, %c0_1] : memref<1x8x32xf32, #tpu.memory_space<vmem>>, vector<1x8x32xf32>
    %c0_2 = arith.constant 0 : index
    %c0_3 = arith.constant 0 : index
    %c0_4 = arith.constant 0 : index
    %1 = vector.load %arg3[%c0_2, %c0_3, %c0_4] : memref<1x8x32xf32, #tpu.memory_space<vmem>>, vector<1x8x32xf32>
    "tpu.trace_start"() <{level = 10 : i32, message = "bqd,bkd->bqk"}> : () -> ()
    %cst = arith.constant dense<0.000000e+00> : vector<1x8x8xf32>
    %2 = tpu.matmul %0, %1, %cst {dimension_numbers = #tpu.dot_dimension_numbers<[2], [2], [1], [1], [0, 0, 0, 1, 1, 1], [0], [0]>} : vector<1x8x32xf32>, vector<1x8x32xf32>, vector<1x8x8xf32> -> vector<1x8x8xf32>
    "tpu.trace_stop"() : () -> ()
    %cst_5 = arith.constant dense<0xFF800000> : vector<1x8xf32>
    %3 = vector.multi_reduction <maximumf>, %2, %cst_5 [2] : vector<1x8x8xf32> to vector<1x8xf32>
    %4 = vector.shape_cast %3 : vector<1x8xf32> to vector<1x1x8xf32>
    %c0_6 = arith.constant 0 : index
    %c0_7 = arith.constant 0 : index
    %c0_8 = arith.constant 0 : index
    %5 = vector.load %arg5[%c0_6, %c0_7, %c0_8] : memref<1x1x8xf32, #tpu.memory_space<vmem>>, vector<1x1x8xf32>
    tpu.vector_store %arg5[%c0_6, %c0_7, %c0_8], %4 {strides = array<i32>} : memref<1x1x8xf32, #tpu.memory_space<vmem>>, vector<1x1x8xf32>,
    %6 = vector.shape_cast %3 : vector<1x8xf32> to vector<1x8x1xf32>
    %7 = vector.broadcast %6 : vector<1x8x1xf32> to vector<1x8x8xf32>
    %8 = arith.subf %2, %7 : vector<1x8x8xf32>
    %9 = math.exp %8 : vector<1x8x8xf32>
    %cst_9 = arith.constant dense<0.000000e+00> : vector<1x8xf32>
    %10 = vector.multi_reduction <add>, %9, %cst_9 [2] : vector<1x8x8xf32> to vector<1x8xf32>
    %11 = vector.shape_cast %10 : vector<1x8xf32> to vector<1x8x1xf32>
    %12 = vector.broadcast %11 : vector<1x8x1xf32> to vector<1x8x8xf32>
    %13 = arith.divf %9, %12 : vector<1x8x8xf32>
    %c0_10 = arith.constant 0 : index
    %c0_11 = arith.constant 0 : index
    %c0_12 = arith.constant 0 : index
    %14 = vector.load %arg4[%c0_10, %c0_11, %c0_12] : memref<1x8x8xf32, #tpu.memory_space<vmem>>, vector<1x8x8xf32>
    tpu.vector_store %arg4[%c0_10, %c0_11, %c0_12], %13 {strides = array<i32>} : memref<1x8x8xf32, #tpu.memory_space<vmem>>, vector<1x8x8xf32>,
    return
  }
  func.func @transform_0(%arg0: i32, %arg1: i32) -> (i32, i32, i32) {
    %c0_i32 = arith.constant 0 : i32
    %c0_i32_0 = arith.constant 0 : i32
    return %arg0, %arg1, %c0_i32 : i32, i32, i32
  }
  func.func @transform_1(%arg0: i32, %arg1: i32) -> (i32, i32, i32) {
    %c0_i32 = arith.constant 0 : i32
    %c0_i32_0 = arith.constant 0 : i32
    %c0_i32_1 = arith.constant 0 : i32
    return %arg0, %c0_i32, %c0_i32_0 : i32, i32, i32
  }
  func.func @transform_2(%arg0: i32, %arg1: i32) -> (i32, i32, i32) {
    %c0_i32 = arith.constant 0 : i32
    %c0_i32_0 = arith.constant 0 : i32
    return %arg0, %arg1, %c0_i32 : i32, i32, i32
  }
  func.func @transform_3(%arg0: i32, %arg1: i32) -> (i32, i32, i32) {
    %c0_i32 = arith.constant 0 : i32
    %c0_i32_0 = arith.constant 0 : i32
    return %arg0, %c0_i32, %arg1 : i32, i32, i32
  }
}

</mosaic_0001>

<llo_original>
// kernel: tpu_custom_call.1
$region0: #{tpu_custom_call.1}
  #allocation0 [shape = 'u32[]', space=smem, size = 0x4, offset = 0x4, fixed_abs, tag = 'smem constant byte address 0x4 - core index']
  #allocation1 [shape = 'u32[144,128]{1,0:T(1,128)}', space=vmem, size = 0x12000, scoped, tag = 'internal scratch']
  %s0 = inlined_call_operand.hbm [shape: f32[2,8,32], index: 0, kind: input, shape index: {}]
  %s1 = inlined_call_operand.hbm [shape: f32[2,8,32], index: 1, kind: input, shape index: {}]
  %s2 = inlined_call_operand.hbm [shape: f32[2,8,8], index: 2, kind: output, shape index: {0}]
  %s3 = inlined_call_operand.hbm [shape: f32[2,1,8], index: 3, kind: output, shape index: {1}]
  %4 = xla_tuple %s2, %s3
  %s5 = sld [smem:[#allocation0]]
  $region57: #{tpu_custom_call.1} parent=0
    _
  %s7 = ssub.s32 1, %s5
  %s8 = scalar_select 0, %s7, %s5
  $region1: #{tpu_custom_call.1} parent=0
    #allocation2 [shape = 'u8[8192]{0}', space=vmem, size = 0x2000, scoped, tag = 'input window, operand 0']
    #allocation3 [shape = 's32[2]{0}', space=sflag, size = 0x8, scoped, tag = 'scoped memory for tpu_custom_call.1']
    #allocation4 [shape = 's32[2]{0}', space=sflag, size = 0x8, scoped, tag = 'scoped memory for tpu_custom_call.1']
    #allocation5 [shape = 'u8[8192]{0}', space=vmem, size = 0x2000, scoped, tag = 'input window, operand 1']
    #allocation6 [shape = 's32[2]{0}', space=sflag, size = 0x8, scoped, tag = 'scoped memory for tpu_custom_call.1']
    #allocation7 [shape = 'u8[8192]{0}', space=vmem, size = 0x2000, scoped, tag = 'output window, operand 0']
    #allocation8 [shape = 'u8[1024]{0}', space=vmem, size = 0x400, scoped, tag = 'output window, operand 1']
    #allocation9 [shape = 's32[2]{0}', space=sflag, size = 0x8, scoped, tag = 'scoped memory for tpu_custom_call.1']
    %9 = vsyncpa [#allocation3], 0
    %s10 = scalar_lea.sflag [#allocation3], 1
    %11 = vsyncpa %s10, 0
    %12 = vsyncpa [#allocation6], 0
    %s13 = scalar_lea.sflag [#allocation6], 1
    %14 = vsyncpa %s13, 0
    %15 = vsyncpa [#allocation4], 0
    %s16 = scalar_lea.sflag [#allocation4], 1
    %17 = vsyncpa %s16, 0
    %18 = vsyncpa [#allocation9], 0
    %s19 = scalar_lea.sflag [#allocation9], 1
    %20 = vsyncpa %s19, 0
    loop: start=0, step=1, limit=4
    $region2: #{tpu_custom_call.1} parent=1 // loop_pre_header
      _
    $region3: #{tpu_custom_call.1} parent=1 // loop_header
      %s22 = sphi 0, %s26
      %p23 = scmp.ge.s32.totalorder %s22, 4
      %s29 = sphi 0, %s41
      %s30 = sphi 0, %s37
      %s31 = sphi 0, %s29
      %s32 = sphi 0, %s30
      %s33 = sphi 0, %s31
      %s34 = sphi 0, %s32
      %s46 = sphi 0, %s48
      %s49 = sphi 0, %s46
      %s50 = sphi 0, %s49
      %s66 = sphi 0, %s50
      %s72 = sphi 0, %s74
      %s75 = sphi 0, %s72
      %s76 = sphi 0, %s75
      %s92 = sphi 0, %s76
      %s100 = sphi 0, %s102
      %s103 = sphi 0, %s100
      %s104 = sphi 0, %s103
      %s120 = sphi 0, %s104
      %s128 = sphi 0, %s130
      %s131 = sphi 0, %s128
      %s132 = sphi 0, %s131
      %s148 = sphi 0, %s132
    $region4: #{tpu_custom_call.1} parent=1 // loop_header_branch
      %25 = sbr.rel (%p23) target = $region8
    $region5: #{tpu_custom_call.1} parent=1 // loop_body
      %s27 = ssub.s32 %s22, 1
      %s28 = ssub.s32 %s22, 2
      %s35 = sadd.s32 1, %s30
      %p36 = scmp.ge.s32.totalorder %s35, 1
      %s37 = scalar_select %p36, 0, %s35
      %s38 = sadd.s32 1, %s29
      %s39 = scalar_select %p36, %s38, %s29
      %p40 = scmp.ge.s32.totalorder %s39, 2
      %s41 = scalar_select %p40, 0, %s39
      %s42 = ssub.s32 %s29, %s41
      %s43 = ssub.s32 %s30, %s37
      %s44 = sor.u32 %s42, %s43
      %p45 = scmp.eq.s32.totalorder %s44, 0
      %s47 = sadd.s32 %s46, 1
      %s48 = scalar_select %p45, %s46, %s47
      %p51 = pneg %p45
      %p52 = scmp.eq.s32.totalorder %s22, 1
      %p53 = por %p51, %p52
      %p54 = scmp.ne.s32.totalorder %s46, %s49
      %p55 = scmp.eq.s32.totalorder %s22, 0
      %p56 = por %p54, %p55
      %p57 = scmp.ne.s32.totalorder %s46, %s49
      %p58 = scmp.eq.s32.totalorder %s27, 1
      %p59 = por %p57, %p58
      %p60 = scmp.ne.s32.totalorder %s49, %s50
      %p61 = scmp.eq.s32.totalorder %s27, 0
      %p62 = por %p60, %p61
      %p63 = scmp.ne.s32.totalorder %s49, %s50
      %p64 = scmp.eq.s32.totalorder %s28, 1
      %p65 = por %p63, %p64
      %p67 = scmp.ne.s32.totalorder %s50, %s66
      %p68 = scmp.eq.s32.totalorder %s28, 0
      %p69 = por %p67, %p68
      %s70 = ssub.s32 %s29, %s41
      %p71 = scmp.eq.s32.totalorder %s70, 0
      %s73 = sadd.s32 %s72, 1
      %s74 = scalar_select %p71, %s72, %s73
      %p77 = pneg %p71
      %p78 = scmp.eq.s32.totalorder %s22, 1
      %p79 = por %p77, %p78
      %p80 = scmp.ne.s32.totalorder %s72, %s75
      %p81 = scmp.eq.s32.totalorder %s22, 0
      %p82 = por %p80, %p81
      %p83 = scmp.ne.s32.totalorder %s72, %s75
      %p84 = scmp.eq.s32.totalorder %s27, 1
      %p85 = por %p83, %p84
      %p86 = scmp.ne.s32.totalorder %s75, %s76
      %p87 = scmp.eq.s32.totalorder %s27, 0
      %p88 = por %p86, %p87
      %p89 = scmp.ne.s32.totalorder %s75, %s76
      %p90 = scmp.eq.s32.totalorder %s28, 1
      %p91 = por %p89, %p90
      %p93 = scmp.ne.s32.totalorder %s76, %s92
      %p94 = scmp.eq.s32.totalorder %s28, 0
      %p95 = por %p93, %p94
      %s96 = ssub.s32 %s29, %s41
      %s97 = ssub.s32 %s30, %s37
      %s98 = sor.u32 %s96, %s97
      %p99 = scmp.eq.s32.totalorder %s98, 0
      %s101 = sadd.s32 %s100, 1
      %s102 = scalar_select %p99, %s100, %s101
      %p105 = pneg %p99
      %p106 = scmp.eq.s32.totalorder %s22, 1
      %p107 = por %p105, %p106
      %p108 = scmp.ne.s32.totalorder %s100, %s103
      %p109 = scmp.eq.s32.totalorder %s22, 0
      %p110 = por %p108, %p109
      %p111 = scmp.ne.s32.totalorder %s100, %s103
      %p112 = scmp.eq.s32.totalorder %s27, 1
      %p113 = por %p111, %p112
      %p114 = scmp.ne.s32.totalorder %s103, %s104
      %p115 = scmp.eq.s32.totalorder %s27, 0
      %p116 = por %p114, %p115
      %p117 = scmp.ne.s32.totalorder %s103, %s104
      %p118 = scmp.eq.s32.totalorder %s28, 1
      %p119 = por %p117, %p118
      %p121 = scmp.ne.s32.totalorder %s104, %s120
      %p122 = scmp.eq.s32.totalorder %s28, 0
      %p123 = por %p121, %p122
      %s124 = ssub.s32 %s29, %s41
      %s125 = ssub.s32 %s30, %s37
      %s126 = sor.u32 %s124, %s125
      %p127 = scmp.eq.s32.totalorder %s126, 0
      %s129 = sadd.s32 %s128, 1
      %s130 = scalar_select %p127, %s128, %s129
      %p133 = pneg %p127
      %p134 = scmp.eq.s32.totalorder %s22, 1
      %p135 = por %p133, %p134
      %p136 = scmp.ne.s32.totalorder %s128, %s131
      %p137 = scmp.eq.s32.totalorder %s22, 0
      %p138 = por %p136, %p137
      %p139 = scmp.ne.s32.totalorder %s128, %s131
      %p140 = scmp.eq.s32.totalorder %s27, 1
      %p141 = por %p139, %p140
      %p142 = scmp.ne.s32.totalorder %s131, %s132
      %p143 = scmp.eq.s32.totalorder %s27, 0
      %p144 = por %p142, %p143
      %p145 = scmp.ne.s32.totalorder %s131, %s132
      %p146 = scmp.eq.s32.totalorder %s28, 1
      %p147 = por %p145, %p146
      %p149 = scmp.ne.s32.totalorder %s132, %s148
      %p150 = scmp.eq.s32.totalorder %s28, 0
      %p151 = por %p149, %p150
      %p152 = scmp.le.s32.totalorder 1, %s22
      %p153 = scmp.lt.s32.totalorder %s22, 3
      %p154 = pnand %p152, %p153
      %p155 = pneg %p154
      // Predicated region
      $region9: #{tpu_custom_call.1} parent=5 // pred_check
        _
      $region10: #{tpu_custom_call.1} parent=5 // pred_check_branch
        %157 = sbr.rel (%p154) target = $region12
      $region11: #{tpu_custom_call.1} parent=5 // pred_region
        %s158 = ssub.s32 %s22, 1
      $region12: #{tpu_custom_call.1} parent=5 // pred_fallthru
        _
      %p159 = scmp.lt.s32.totalorder %s22, 2
      // Predicated region
      $region13: #{tpu_custom_call.1} parent=5 // pred_check
        %p160 = pneg %p159
      $region14: #{tpu_custom_call.1} parent=5 // pred_check_branch
        %162 = sbr.rel (%p160) target = $region16
      $region15: #{tpu_custom_call.1} parent=5 // pred_region
        // Predicated region
        $region17: #{tpu_custom_call.1} parent=15 // pred_check
          %p163 = pneg %p56
        $region18: #{tpu_custom_call.1} parent=15 // pred_check_branch
          %165 = sbr.rel (%p163) target = $region20
        $region19: #{tpu_custom_call.1} parent=15 // pred_region
          %s166 = sand.u32 %s46, 1
          %s167 = scalar_lea.sflag [#allocation3], %s166
          %s168 = sand.u32 %s46, 1
          %s169 = smul.addr %s168, 8
          %s170 = scalar_lea.vmem [#allocation2], %s169
          %s172 = ssub.s32 128, 128
          %173 = vsyncadd %s167, %s172
          %s174 = sadd.s32 %s30, %s29
          %s175 = smul.addr %s174, 128
          %s176 = scalar_lea.hbm %s0, %s175
          %s178 = sshll.u32 %s170, 4
          %s179 = int_to_ptr.vmem [resolvable:$true] %s178
          %181 = dma.hbm_to_vmem [thread:$0]  %s176, 128, %s179, %s167
        $region20: #{tpu_custom_call.1} parent=15 // pred_fallthru
          _
        // Predicated region
        $region21: #{tpu_custom_call.1} parent=15 // pred_check
          %p182 = pneg %p82
        $region22: #{tpu_custom_call.1} parent=15 // pred_check_branch
          %184 = sbr.rel (%p182) target = $region24
        $region23: #{tpu_custom_call.1} parent=15 // pred_region
          %s185 = sand.u32 %s72, 1
          %s186 = scalar_lea.sflag [#allocation6], %s185
          %s187 = sand.u32 %s72, 1
          %s188 = smul.addr %s187, 8
          %s189 = scalar_lea.vmem [#allocation5], %s188
          %s191 = ssub.s32 128, 128
          %192 = vsyncadd %s186, %s191
          %s193 = smul.addr %s29, 128
          %s194 = scalar_lea.hbm %s1, %s193
          %s196 = sshll.u32 %s189, 4
          %s197 = int_to_ptr.vmem [resolvable:$true] %s196
          %199 = dma.hbm_to_vmem [thread:$0]  %s194, 128, %s197, %s186
        $region24: #{tpu_custom_call.1} parent=15 // pred_fallthru
          _
      $region16: #{tpu_custom_call.1} parent=5 // pred_fallthru
        _
      %p200 = scmp.le.s32.totalorder 1, %s22
      %p201 = scmp.lt.s32.totalorder %s22, 3
      %p202 = pnand %p200, %p201
      %p203 = pneg %p202
      // Predicated region
      $region25: #{tpu_custom_call.1} parent=5 // pred_check
        _
      $region26: #{tpu_custom_call.1} parent=5 // pred_check_branch
        %205 = sbr.rel (%p202) target = $region28
      $region27: #{tpu_custom_call.1} parent=5 // pred_region
        %s206 = ssub.s32 %s22, 1
        %s207 = sand.u32 %s49, 1
        %s208 = scalar_lea.sflag [#allocation3], %s207
        %s209 = sand.u32 %s49, 1
        %s210 = smul.addr %s209, 8
        %s211 = scalar_lea.vmem [#allocation2], %s210
        // Predicated region
        $region29: #{tpu_custom_call.1} parent=27 // pred_check
          %p212 = pneg %p62
        $region30: #{tpu_custom_call.1} parent=27 // pred_check_branch
          %214 = sbr.rel (%p212) target = $region32
        $region31: #{tpu_custom_call.1} parent=27 // pred_region
          %215 = dma.done %s208, 128
        $region32: #{tpu_custom_call.1} parent=27 // pred_fallthru
          _
        %s216 = sand.u32 %s75, 1
        %s217 = scalar_lea.sflag [#allocation6], %s216
        %s218 = sand.u32 %s75, 1
        %s219 = smul.addr %s218, 8
        %s220 = scalar_lea.vmem [#allocation5], %s219
        // Predicated region
        $region33: #{tpu_custom_call.1} parent=27 // pred_check
          %p221 = pneg %p88
        $region34: #{tpu_custom_call.1} parent=27 // pred_check_branch
          %223 = sbr.rel (%p221) target = $region36
        $region35: #{tpu_custom_call.1} parent=27 // pred_region
          %224 = dma.done %s217, 128
        $region36: #{tpu_custom_call.1} parent=27 // pred_fallthru
          _
        %s225 = sand.u32 %s49, 1
        %s226 = scalar_lea.sflag [#allocation3], %s225
        %s227 = sand.u32 %s49, 1
        %s228 = smul.addr %s227, 8
        %s229 = scalar_lea.vmem [#allocation2], %s228
        %p230 = pneg %p62
        %p231 = pneg %p59
        %s232 = sand.u32 %s75, 1
        %s233 = scalar_lea.sflag [#allocation6], %s232
        %s234 = sand.u32 %s75, 1
        %s235 = smul.addr %s234, 8
        %s236 = scalar_lea.vmem [#allocation5], %s235
        %p237 = pneg %p88
        %p238 = pneg %p85
        %p239 = pneg %p116
        %p240 = pneg %p113
        %s241 = sand.u32 %s103, 1
        %s242 = scalar_lea.sflag [#allocation4], %s241
        %s243 = sand.u32 %s103, 1
        %s244 = smul.addr %s243, 8
        %s245 = scalar_lea.vmem [#allocation7], %s244
        %p246 = pneg %p144
        %p247 = pneg %p141
        %s248 = sand.u32 %s131, 1
        %s249 = scalar_lea.sflag [#allocation9], %s248
        %s250 = sand.u32 %s131, 1
        %s251 = scalar_lea.vmem [#allocation8], %s250
        %v252 = vld [vmem:[%s211] sm:$0xff]
        %v253 = vld [vmem:[%s220] sm:$0xff]
        %vm254 = vcmask 261120
        %v256 = vsel %vm254, %v252, 0
        %v259 = vsel %vm254, %v253, 0
        %261 = vmatprep.subr.mxu0 0.0
        %262 = vmatpush1.xpose.msra.mxu0 %v259
        %263 = vmatprep.subr.mxu0 0.0
        %264 = vmatpush1.xpose.msra.mxu0 0.0
        %265 = vmatprep.subr.mxu0 0.0
        %266 = vmatpush1.xpose.msra.mxu0 0.0
        %267 = vmatprep.subr.mxu0 0.0
        %268 = vmatpush1.xpose.msra.mxu0 0.0
        %269 = vmatprep.subr.mxu0 0.0
        %270 = vmatpush1.xpose.msra.mxu0 0.0
        %271 = vmatprep.subr.mxu0 0.0
        %272 = vmatpush1.xpose.msra.mxu0 0.0
        %273 = vmatprep.subr.mxu0 0.0
        %274 = vmatpush1.xpose.msra.mxu0 0.0
        %275 = vmatprep.subr.mxu0 0.0
        %276 = vmatpush1.xpose.msra.mxu0 0.0
        %277 = vmatprep.subr.mxu0 0.0
        %278 = vmatpush1.xpose.msra.mxu0 0.0
        %279 = vmatprep.subr.mxu0 0.0
        %280 = vmatpush1.xpose.msra.mxu0 0.0
        %281 = vmatprep.subr.mxu0 0.0
        %282 = vmatpush1.xpose.msra.mxu0 0.0
        %283 = vmatprep.subr.mxu0 0.0
        %284 = vmatpush1.xpose.msra.mxu0 0.0
        %285 = vmatprep.subr.mxu0 0.0
        %286 = vmatpush1.xpose.msra.mxu0 0.0
        %287 = vmatprep.subr.mxu0 0.0
        %288 = vmatpush1.xpose.msra.mxu0 0.0
        %289 = vmatprep.subr.mxu0 0.0
        %290 = vmatpush1.xpose.msra.mxu0 0.0
        %291 = vmatprep.subr.mxu0 0.0
        %292 = vmatpush1.xpose.msra.mxu0 0.0
        %293 = vmatprep.subr.mxu0 0.0
        %294 = vmatpush1.xpose.msra.mxu0 0.0
        %295 = vmatprep.subr.mxu0 0.0
        %296 = vmatpush1.xpose.msra.mxu0 0.0
        %297 = vmatprep.subr.mxu0 0.0
        %298 = vmatpush1.xpose.msra.mxu0 0.0
        %299 = vmatprep.subr.mxu0 0.0
        %300 = vmatpush1.xpose.msra.mxu0 0.0
        %301 = vmatprep.subr.mxu0 0.0
        %302 = vmatpush1.xpose.msra.mxu0 0.0
        %303 = vmatprep.subr.mxu0 0.0
        %304 = vmatpush1.xpose.msra.mxu0 0.0
        %305 = vmatprep.subr.mxu0 0.0
        %306 = vmatpush1.xpose.msra.mxu0 0.0
        %307 = vmatprep.subr.mxu0 0.0
        %308 = vmatpush1.xpose.msra.mxu0 0.0
        %309 = vmatprep.subr.mxu0 0.0
        %310 = vmatpush1.xpose.msra.mxu0 0.0
        %311 = vmatprep.subr.mxu0 0.0
        %312 = vmatpush1.xpose.msra.mxu0 0.0
        %313 = vmatprep.subr.mxu0 0.0
        %314 = vmatpush1.xpose.msra.mxu0 0.0
        %315 = vmatprep.subr.mxu0 0.0
        %316 = vmatpush1.xpose.msra.mxu0 0.0
        %317 = vmatprep.subr.mxu0 0.0
        %318 = vmatpush1.xpose.msra.mxu0 0.0
        %319 = vmatprep.subr.mxu0 0.0
        %320 = vmatpush1.xpose.msra.mxu0 0.0
        %321 = vmatprep.subr.mxu0 0.0
        %322 = vmatpush1.xpose.msra.mxu0 0.0
        %323 = vmatprep.subr.mxu0 0.0
        %324 = vmatpush1.xpose.msra.mxu0 0.0
        %325 = vmatprep.mubr.f32.mxu0 0.0
        %326 = vmatmul.mubr.f32.gmra.mrb[0].mxu0 %v256
        %v327 = vpop.f32.mrb[0].mxu0
        %v328 = vadd.f32 0.0, %v327
        %v329 = vpop.f32.mrb[0].mxu0
        %330 = vdwg.mxu0
        %vm331 = vcmask 64512
        %v332 = vsel %vm331, %v328, -inf
        %333 = vmax.xlane.f32.xlu0 %v332
        %v334 = vpop.xlane.xlu0 %333
        %v336 = vlaneseq
        %v337 = vand.u32 %v336, 127
        %v338 = vlaneseq
        %v339 = vshrl.u32 %v338, 7
        %v340 = vsub.s32 %v337, %v339
        %v341 = vrot.slane %v334, %v340
        %vm343 = vcmask 57344
        %344 = vst.msk [vmem:[%s251] sm:$0x1] %vm343, %v341
        %v345 = vsub.f32 %v328, %v334
        %v346 = vmul.f32 %v345, 1.442695
        %v347 = vpow.pop %v346
        %v348 = vsel %vm331, %v347, 0.0
        %349 = vadd.xlane.f32.xlu0 %v348
        %v350 = vpop.xlane.xlu0 %349
        %v351 = vrcp.pop %v350
        %v352 = vmul.f32 %v347, %v351
        %353 = vst.msk [vmem:[%s245] sm:$0xff] %vm331, %v352
        %s354 = sand.u32 %s103, 1
        %s355 = scalar_lea.sflag [#allocation4], %s354
        %s356 = sand.u32 %s103, 1
        %s357 = smul.addr %s356, 8
        %s358 = scalar_lea.vmem [#allocation7], %s357
        %s359 = sand.u32 %s131, 1
        %s360 = scalar_lea.sflag [#allocation9], %s359
        %s361 = sand.u32 %s131, 1
        %s362 = scalar_lea.vmem [#allocation8], %s361
        // Predicated region
        $region37: #{tpu_custom_call.1} parent=27 // pred_check
          %p363 = pneg %p113
        $region38: #{tpu_custom_call.1} parent=27 // pred_check_branch
          %365 = sbr.rel (%p363) target = $region40
        $region39: #{tpu_custom_call.1} parent=27 // pred_region
          %s367 = ssub.s32 128, 128
          %368 = vsyncadd %s355, %s367
          %s369 = sadd.s32 %s32, %s31
          %s370 = smul.addr %s369, 128
          %s371 = scalar_lea.hbm %s2, %s370
          %s373 = sshll.u32 %s358, 4
          %s374 = int_to_ptr.vmem [resolvable:$true] %s373
          %376 = dma.vmem_to_hbm [thread:$0]  %s374, 128, %s371, %s355
        $region40: #{tpu_custom_call.1} parent=27 // pred_fallthru
          _
        // Predicated region
        $region41: #{tpu_custom_call.1} parent=27 // pred_check
          %p377 = pneg %p141
        $region42: #{tpu_custom_call.1} parent=27 // pred_check_branch
          %379 = sbr.rel (%p377) target = $region44
        $region43: #{tpu_custom_call.1} parent=27 // pred_region
          %s381 = ssub.s32 16, 16
          %382 = vsyncadd %s360, %s381
          %s383 = sadd.s32 %s32, %s31
          %s384 = smul.addr %s383, 16
          %s385 = scalar_lea.hbm %s3, %s384
          %s387 = sshll.u32 %s362, 4
          %s388 = int_to_ptr.vmem [resolvable:$true] %s387
          %390 = dma.vmem_to_hbm [thread:$0]  %s388, 16, %s385, %s360
        $region44: #{tpu_custom_call.1} parent=27 // pred_fallthru
          _
      $region28: #{tpu_custom_call.1} parent=5 // pred_fallthru
        _
      %p391 = scmp.le.s32.totalorder 2, %s22
      // Predicated region
      $region45: #{tpu_custom_call.1} parent=5 // pred_check
        %p392 = pneg %p391
      $region46: #{tpu_custom_call.1} parent=5 // pred_check_branch
        %394 = sbr.rel (%p392) target = $region48
      $region47: #{tpu_custom_call.1} parent=5 // pred_region
        %s395 = ssub.s32 %s22, 2
        // Predicated region
        $region49: #{tpu_custom_call.1} parent=47 // pred_check
          %p396 = pneg %p119
        $region50: #{tpu_custom_call.1} parent=47 // pred_check_branch
          %398 = sbr.rel (%p396) target = $region52
        $region51: #{tpu_custom_call.1} parent=47 // pred_region
          %s399 = sand.u32 %s104, 1
          %s400 = scalar_lea.sflag [#allocation4], %s399
          %s401 = sand.u32 %s104, 1
          %s402 = smul.addr %s401, 8
          %s403 = scalar_lea.vmem [#allocation7], %s402
          %404 = dma.done %s400, 128
        $region52: #{tpu_custom_call.1} parent=47 // pred_fallthru
          _
        // Predicated region
        $region53: #{tpu_custom_call.1} parent=47 // pred_check
          %p405 = pneg %p147
        $region54: #{tpu_custom_call.1} parent=47 // pred_check_branch
          %407 = sbr.rel (%p405) target = $region56
        $region55: #{tpu_custom_call.1} parent=47 // pred_region
          %s408 = sand.u32 %s132, 1
          %s409 = scalar_lea.sflag [#allocation9], %s408
          %s410 = sand.u32 %s132, 1
          %s411 = scalar_lea.vmem [#allocation8], %s410
          %412 = dma.done %s409, 16
        $region56: #{tpu_custom_call.1} parent=47 // pred_fallthru
          _
      $region48: #{tpu_custom_call.1} parent=5 // pred_fallthru
        _
    $region6: #{tpu_custom_call.1} parent=1 // loop_footer
      %s26 = sadd.s32 1, %s22
    $region7: #{tpu_custom_call.1} parent=1 // loop_footer_branch
      %21 = sbr.rel target = $region3
    $region8: #{tpu_custom_call.1} parent=1 // loop_exit
      _
    %413 = vsyncpa [#allocation3], 1
    %s414 = scalar_lea.sflag [#allocation3], 1
    %415 = vsyncpa %s414, 1
    %416 = vsyncpa [#allocation6], 1
    %s417 = scalar_lea.sflag [#allocation6], 1
    %418 = vsyncpa %s417, 1
    %419 = vsyncpa [#allocation4], 1
    %s420 = scalar_lea.sflag [#allocation4], 1
    %421 = vsyncpa %s420, 1
    %422 = vsyncpa [#allocation9], 1
    %s423 = scalar_lea.sflag [#allocation9], 1
    %424 = vsyncpa %s423, 1

</llo_original>
